<compile_context>
chip_gen: v7x
topology: tpu7x:2x2x1
jax: 0.10.0
libtpu: 0.0.40
codegen_flags: <defaults>
</compile_context>

<pallas_src>
import functools

import jax
import jax.numpy as jnp
import numpy as np
from jax import lax
from jax.experimental import pallas as pl
from jax.experimental.pallas import tpu as pltpu


def _layer_norm(x, gamma, beta, eps=1e-5):
    # Matches torch.nn.LayerNorm over the last dim (biased variance, eps=1e-5).
    mu = jnp.mean(x, axis=-1, keepdims=True)
    var = jnp.mean((x - mu) ** 2, axis=-1, keepdims=True)
    return (x - mu) * lax.rsqrt(var + eps) * gamma + beta


# ---------------------------------------------------------------------------
# Kernel A: per-(batch, head) attention.
# Refs: q (1,1,Lq,D), k (1,1,Lk,D), v (1,1,Lk,D), mask (1,Lq,Lk) -> o (1,1,Lq,D)
# ---------------------------------------------------------------------------
def _attention_kernel(q_ref, k_ref, v_ref, mask_ref, o_ref, *, scale):
    q = q_ref[0, 0]      # (Lq, D)
    k = k_ref[0, 0]      # (Lk, D)
    v = v_ref[0, 0]      # (Lk, D)
    mask = mask_ref[0]   # (Lq, Lk)

    # q @ k^T expressed as a contraction-dim swap (no materialized transpose).
    energy = lax.dot_general(
        q, k, dimension_numbers=(((1,), (1,)), ((), ())),
        preferred_element_type=jnp.float32)

    # masked_fill(mask == 0, -inf) -> large finite negative (NaN-safe).
    energy = jnp.where(mask == 0, -1e30, energy)

    # NOTE: the PyTorch module scales by 1/sqrt(embedding_size), NOT
    # 1/sqrt(head_dim); we keep that quirk for semantic parity.
    scores = energy * scale
    scores = scores - jnp.max(scores, axis=-1, keepdims=True)
    p = jnp.exp(scores)                                   # f32 (v5e-safe)
    inv_denom = pl.reciprocal(jnp.sum(p, axis=-1, keepdims=True), approx=True)
    attn = p * inv_denom                                  # softmax over k

    o_ref[0, 0] = jnp.dot(attn.astype(v.dtype), v,
                          preferred_element_type=jnp.float32).astype(o_ref.dtype)


# ---------------------------------------------------------------------------
# Kernel B: fulcon_out + residual + LN1 + FFN + residual + LN2 over a
# (batch*seq) row tile. Refs: att (tm,E), q (tm,E), weights/biases, out (tm,E)
# ---------------------------------------------------------------------------
def _post_attention_kernel(att_ref, q_ref, wo_ref, bo_ref, g1_ref, be1_ref,
                           w1_ref, bf1_ref, w2_ref, bf2_ref, g2_ref, be2_ref,
                           o_ref, *, compute_dtype):
    att = att_ref[...].astype(compute_dtype)
    q = q_ref[...]                                   # residual kept in f32

    # fulcon_out (bias broadcast added once per tile)
    proj = jnp.dot(att, wo_ref[...],
                   preferred_element_type=jnp.float32) + bo_ref[...]

    # TODO(synk): nn.Dropout is treated as identity (eval-mode semantics).
    x = _layer_norm(proj + q, g1_ref[...], be1_ref[...])     # f32 LN

    # feed-forward: Linear -> ReLU -> Linear
    h1 = jnp.dot(x.astype(compute_dtype), w1_ref[...],
                 preferred_element_type=jnp.float32) + bf1_ref[...]
    h1 = jnp.maximum(h1, 0.0)
    ff = jnp.dot(h1.astype(compute_dtype), w2_ref[...],
                 preferred_element_type=jnp.float32) + bf2_ref[...]

    o_ref[...] = _layer_norm(ff + x, g2_ref[...], be2_ref[...]).astype(o_ref.dtype)


def transformer_block(value, key, query, mask, params, *, heads,
                      compute_dtype=jnp.float32):
    """value/key: (N, Lk, E), query: (N, Lq, E), mask: (N, Lq, Lk) -> (N, Lq, E)."""
    N, Lq, E = query.shape
    Lk = key.shape[1]
    D = E // heads
    hidden = params["w1"].shape[1]
    scale = 1.0 / (E ** 0.5)  # module semantics: sqrt(embedding_size)

    # --- layout plumbing outside the kernel: heads on a leading axis so the
    #     lane (last) axis is never sliced inside the kernel ---
    def split_heads(x, L):
        return x.reshape(N, L, heads, D).transpose(0, 2, 1, 3).astype(compute_dtype)

    q4 = split_heads(query, Lq)   # (N, H, Lq, D)
    k4 = split_heads(key, Lk)     # (N, H, Lk, D)
    v4 = split_heads(value, Lk)   # (N, H, Lk, D)

    att_kernel = functools.partial(_attention_kernel, scale=scale)

    # TODO(synk): for long sequences, add flash-style Lk tiling with an online
    # softmax so the (Lq, Lk) score tile fits v7x's 64 MiB VMEM.
    att = pl.pallas_call(
        att_kernel,
        out_shape=jax.ShapeDtypeStruct((N, heads, Lq, D), jnp.float32),
        grid=(N, heads),
        in_specs=[
            pl.BlockSpec((1, 1, Lq, D), lambda b, h: (b, h, 0, 0)),  # q
            pl.BlockSpec((1, 1, Lk, D), lambda b, h: (b, h, 0, 0)),  # k
            pl.BlockSpec((1, 1, Lk, D), lambda b, h: (b, h, 0, 0)),  # v
            pl.BlockSpec((1, Lq, Lk), lambda b, h: (b, 0, 0)),       # mask
        ],
        out_specs=pl.BlockSpec((1, 1, Lq, D), lambda b, h: (b, h, 0, 0)),
        compiler_params=pltpu.CompilerParams(
            dimension_semantics=("parallel", "parallel"),
            vmem_limit_bytes=48 * 1024 * 1024),
    )(q4, k4, v4, mask)

    # Concatenate heads on the lane axis / fold (batch, seq) into the matmul M
    # dimension in the wrapper (cheap layout plumbing, keeps kernel tiles clean).
    att_flat = att.transpose(0, 2, 1, 3).reshape(N * Lq, E)
    q_flat = query.reshape(N * Lq, E).astype(jnp.float32)

    M = N * Lq
    # Largest row tile that divides M (multiples of 8 keep the sublane tiling
    # happy); 256-row tiles feed the v6e/v7x MXU, 128 matches v5e.
    tm = next((t for t in (1024, 512, 256, 128, 64, 32, 16, 8) if M % t == 0), M)

    post_kernel = functools.partial(_post_attention_kernel,
                                    compute_dtype=compute_dtype)

    def row_spec(width):
        return pl.BlockSpec((tm, width), lambda i: (i, 0))

    def const_spec(shape):
        # TODO(synk): on v7x, pipeline_mode=pl.Buffered(1) on these constant
        # weight specs would halve their resident VMEM.
        return pl.BlockSpec(shape, lambda i: (0,) * len(shape))

    wo = params["wo"].astype(compute_dtype)
    w1 = params["w1"].astype(compute_dtype)
    w2 = params["w2"].astype(compute_dtype)

    out_flat = pl.pallas_call(
        post_kernel,
        out_shape=jax.ShapeDtypeStruct((M, E), jnp.float32),
        grid=(M // tm,),
        in_specs=[
            row_spec(E),               # attention output rows
            row_spec(E),               # query rows (residual)
            const_spec((E, E)),        # wo (in, out)
            const_spec((1, E)),        # bo
            const_spec((1, E)),        # gamma1
            const_spec((1, E)),        # beta1
            const_spec((E, hidden)),   # w1
            const_spec((1, hidden)),   # bf1
            const_spec((hidden, E)),   # w2
            const_spec((1, E)),        # bf2
            const_spec((1, E)),        # gamma2
            const_spec((1, E)),        # beta2
        ],
        out_specs=row_spec(E),
        compiler_params=pltpu.CompilerParams(
            dimension_semantics=("parallel",),
            vmem_limit_bytes=48 * 1024 * 1024),
    )(att_flat, q_flat, wo, params["bo"], params["g1"], params["be1"],
      w1, params["bf1"], w2, params["bf2"], params["g2"], params["be2"])

    return out_flat.reshape(N, Lq, E)


def reference(value, key_, query, mask, p, *, heads):
    """Plain-JAX mirror of the PyTorch forward (dropout = identity)."""
    N, Lq, E = query.shape
    D = E // heads
    qh = query.reshape(N, Lq, heads, D)
    kh = key_.reshape(N, -1, heads, D)
    vh = value.reshape(N, -1, heads, D)
    energy = jnp.einsum('nqhd,nkhd->nhqk', qh, kh)
    energy = jnp.where(mask[:, None, :, :] == 0, -jnp.inf, energy)
    attn = jax.nn.softmax(energy / (E ** 0.5), axis=3)
    out = jnp.einsum('nhqk,nkhd->nqhd', attn, vh).reshape(N, Lq, E)
    att = out @ p["wo"] + p["bo"]
    x = _layer_norm(att + query, p["g1"], p["be1"])
    ff = jnp.maximum(x @ p["w1"] + p["bf1"], 0.0) @ p["w2"] + p["bf2"]
    return _layer_norm(ff + x, p["g2"], p["be2"])


if __name__ == "__main__":
    N, L, E, H, FE = 2, 8, 32, 4, 4
    hidden = FE * E

    root = jax.random.PRNGKey(0)
    ks = jax.random.split(root, 9)

    q = jax.random.normal(ks[0], (N, L, E), jnp.float32)
    k = jax.random.normal(ks[1], (N, L, E), jnp.float32)
    v = jax.random.normal(ks[2], (N, L, E), jnp.float32)
    # causal mask, broadcast across heads (no fully-masked rows)
    mask = jnp.broadcast_to(jnp.tril(jnp.ones((L, L), jnp.float32)), (N, L, L))

    # Deterministic parameter init.  Linear weights are stored (in, out)
    # (i.e. already transposed vs torch's (out, in) convention).
    params = dict(
        wo=jax.random.normal(ks[3], (E, E), jnp.float32) * 0.1,
        bo=jax.random.normal(ks[4], (1, E), jnp.float32) * 0.1,
        g1=jnp.ones((1, E), jnp.float32),
        be1=jnp.zeros((1, E), jnp.float32),
        w1=jax.random.normal(ks[5], (E, hidden), jnp.float32) * 0.1,
        bf1=jax.random.normal(ks[6], (1, hidden), jnp.float32) * 0.1,
        w2=jax.random.normal(ks[7], (hidden, E), jnp.float32) * 0.1,
        bf2=jax.random.normal(ks[8], (1, E), jnp.float32) * 0.1,
        g2=jnp.ones((1, E), jnp.float32),
        be2=jnp.zeros((1, E), jnp.float32),
    )

    # f32 compute path (matches the PyTorch module's numerics).
    out = transformer_block(v, k, q, mask, params, heads=H,
                            compute_dtype=jnp.float32)
    out = jax.block_until_ready(out)

    ref = reference(v, k, q, mask, params, heads=H)
    # Tolerance accounts for the EUP approximate reciprocal in the softmax.
    np.testing.assert_allclose(np.asarray(out), np.asarray(ref),
                               rtol=2e-2, atol=2e-2)

    # bf16 MXU path (v6e/v7x throughput + halved DMA bytes); sanity-check only.
    out_bf16 = transformer_block(v, k, q, mask, params, heads=H,
                                 compute_dtype=jnp.bfloat16)
    out_bf16 = jax.block_until_ready(out_bf16)
    assert out_bf16.shape == ref.shape
    assert bool(jnp.all(jnp.isfinite(out_bf16)))

    print("KERNEL_OK")
</pallas_src>

<mosaic_0001>
module attributes {stable_mosaic.version = 11 : i64} {
  func.func @_attention_kernel(%arg0: i32, %arg1: i32, %arg2: memref<1x1x8x8xf32, #tpu.memory_space<vmem>>, %arg3: memref<1x1x8x8xf32, #tpu.memory_space<vmem>>, %arg4: memref<1x1x8x8xf32, #tpu.memory_space<vmem>>, %arg5: memref<1x8x8xf32, #tpu.memory_space<vmem>>, %arg6: memref<1x1x8x8xf32, #tpu.memory_space<vmem>>) attributes {dimension_semantics = [#tpu.dimension_semantics<parallel>, #tpu.dimension_semantics<parallel>], iteration_bounds = array<i64: 2, 4>, scalar_prefetch = 0 : i64, scratch_operands = 0 : i64, tpu.core_type = #tpu.core_type<tc>, window_params = [{transform_indices = @transform_0, window_bounds = array<i64: 1, 1, 8, 8>}, {transform_indices = @transform_1, window_bounds = array<i64: 1, 1, 8, 8>}, {transform_indices = @transform_2, window_bounds = array<i64: 1, 1, 8, 8>}, {transform_indices = @transform_3, window_bounds = array<i64: 1, 8, 8>}, {transform_indices = @transform_4, window_bounds = array<i64: 1, 1, 8, 8>}]} {
    %c0 = arith.constant 0 : index
    %c0_0 = arith.constant 0 : index
    %c0_1 = arith.constant 0 : index
    %c0_2 = arith.constant 0 : index
    %0 = vector.load %arg2[%c0, %c0_0, %c0_1, %c0_2] : memref<1x1x8x8xf32, #tpu.memory_space<vmem>>, vector<1x1x8x8xf32>
    %1 = vector.shape_cast %0 : vector<1x1x8x8xf32> to vector<8x8xf32>
    %c0_3 = arith.constant 0 : index
    %c0_4 = arith.constant 0 : index
    %c0_5 = arith.constant 0 : index
    %c0_6 = arith.constant 0 : index
    %2 = vector.load %arg3[%c0_3, %c0_4, %c0_5, %c0_6] : memref<1x1x8x8xf32, #tpu.memory_space<vmem>>, vector<1x1x8x8xf32>
    %3 = vector.shape_cast %2 : vector<1x1x8x8xf32> to vector<8x8xf32>
    %c0_7 = arith.constant 0 : index
    %c0_8 = arith.constant 0 : index
    %c0_9 = arith.constant 0 : index
    %c0_10 = arith.constant 0 : index
    %4 = vector.load %arg4[%c0_7, %c0_8, %c0_9, %c0_10] : memref<1x1x8x8xf32, #tpu.memory_space<vmem>>, vector<1x1x8x8xf32>
    %5 = vector.shape_cast %4 : vector<1x1x8x8xf32> to vector<8x8xf32>
    %c0_11 = arith.constant 0 : index
    %c0_12 = arith.constant 0 : index
    %c0_13 = arith.constant 0 : index
    %6 = vector.load %arg5[%c0_11, %c0_12, %c0_13] : memref<1x8x8xf32, #tpu.memory_space<vmem>>, vector<1x8x8xf32>
    %7 = vector.shape_cast %6 : vector<1x8x8xf32> to vector<8x8xf32>
    %cst = arith.constant dense<0.000000e+00> : vector<8x8xf32>
    %8 = tpu.matmul %1, %3, %cst {dimension_numbers = #tpu.dot_dimension_numbers<[1], [1], [0], [0], [0, 0, 1, 0], [], []>} : vector<8x8xf32>, vector<8x8xf32>, vector<8x8xf32> -> vector<8x8xf32>
    %cst_14 = arith.constant 0.000000e+00 : f32
    %9 = vector.broadcast %cst_14 : f32 to vector<8x8xf32>
    %10 = arith.cmpf oeq, %7, %9 : vector<8x8xf32>
    %cst_15 = arith.constant -1.000000e+30 : f32
    %11 = vector.broadcast %cst_15 : f32 to vector<8x8xf32>
    %12 = arith.select %10, %11, %8 : vector<8x8xi1>, vector<8x8xf32>
    %cst_16 = arith.constant 0.176776692 : f32
    %13 = vector.broadcast %cst_16 : f32 to vector<8x8xf32>
    %14 = arith.mulf %12, %13 : vector<8x8xf32>
    %cst_17 = arith.constant dense<0xFF800000> : vector<8xf32>
    %15 = vector.multi_reduction <maximumf>, %14, %cst_17 [1] : vector<8x8xf32> to vector<8xf32>
    %16 = vector.shape_cast %15 : vector<8xf32> to vector<8x1xf32>
    %17 = vector.broadcast %16 : vector<8x1xf32> to vector<8x8xf32>
    %18 = arith.subf %14, %17 : vector<8x8xf32>
    %19 = math.exp %18 : vector<8x8xf32>
    %cst_18 = arith.constant dense<0.000000e+00> : vector<8xf32>
    %20 = vector.multi_reduction <add>, %19, %cst_18 [1] : vector<8x8xf32> to vector<8xf32>
    %21 = vector.shape_cast %20 : vector<8xf32> to vector<8x1xf32>
    %22 = tpu.reciprocal %21 {approx = true} : vector<8x1xf32> -> vector<8x1xf32>
    %23 = vector.broadcast %22 : vector<8x1xf32> to vector<8x8xf32>
    %24 = arith.mulf %19, %23 : vector<8x8xf32>
    %cst_19 = arith.constant dense<0.000000e+00> : vector<8x8xf32>
    %25 = tpu.matmul %24, %5, %cst_19 {dimension_numbers = #tpu.dot_dimension_numbers<[1], [0], [0], [1], [0, 0, 1, 1], [], []>} : vector<8x8xf32>, vector<8x8xf32>, vector<8x8xf32> -> vector<8x8xf32>
    %c0_20 = arith.constant 0 : index
    %c0_21 = arith.constant 0 : index
    %c0_22 = arith.constant 0 : index
    %c0_23 = arith.constant 0 : index
    %26 = vector.load %arg6[%c0_20, %c0_21, %c0_22, %c0_23] : memref<1x1x8x8xf32, #tpu.memory_space<vmem>>, vector<1x1x8x8xf32>
    %27 = vector.shape_cast %26 : vector<1x1x8x8xf32> to vector<8x8xf32>
    %28 = vector.shape_cast %25 : vector<8x8xf32> to vector<1x1x8x8xf32>
    tpu.vector_store %arg6[%c0_20, %c0_21, %c0_22, %c0_23], %28 {strides = array<i32>} : memref<1x1x8x8xf32, #tpu.memory_space<vmem>>, vector<1x1x8x8xf32>,
    return
  }
  func.func @transform_0(%arg0: i32, %arg1: i32) -> (i32, i32, i32, i32) {
    %c0_i32 = arith.constant 0 : i32
    %c0_i32_0 = arith.constant 0 : i32
    %c0_i32_1 = arith.constant 0 : i32
    return %arg0, %arg1, %c0_i32, %c0_i32_0 : i32, i32, i32, i32
  }
  func.func @transform_1(%arg0: i32, %arg1: i32) -> (i32, i32, i32, i32) {
    %c0_i32 = arith.constant 0 : i32
    %c0_i32_0 = arith.constant 0 : i32
    %c0_i32_1 = arith.constant 0 : i32
    return %arg0, %arg1, %c0_i32, %c0_i32_0 : i32, i32, i32, i32
  }
  func.func @transform_2(%arg0: i32, %arg1: i32) -> (i32, i32, i32, i32) {
    %c0_i32 = arith.constant 0 : i32
    %c0_i32_0 = arith.constant 0 : i32
    %c0_i32_1 = arith.constant 0 : i32
    return %arg0, %arg1, %c0_i32, %c0_i32_0 : i32, i32, i32, i32
  }
  func.func @transform_3(%arg0: i32, %arg1: i32) -> (i32, i32, i32) {
    %c0_i32 = arith.constant 0 : i32
    %c0_i32_0 = arith.constant 0 : i32
    %c0_i32_1 = arith.constant 0 : i32
    return %arg0, %c0_i32, %c0_i32_0 : i32, i32, i32
  }
  func.func @transform_4(%arg0: i32, %arg1: i32) -> (i32, i32, i32, i32) {
    %c0_i32 = arith.constant 0 : i32
    %c0_i32_0 = arith.constant 0 : i32
    %c0_i32_1 = arith.constant 0 : i32
    return %arg0, %arg1, %c0_i32, %c0_i32_0 : i32, i32, i32, i32
  }
}

</mosaic_0001>

<llo_original>
// kernel: tpu_custom_call.1
$region0: #{tpu_custom_call.1}
  #allocation0 [shape = 'u32[]', space=smem, size = 0x4, offset = 0x4, fixed_abs, tag = 'smem constant byte address 0x4 - core index']
  #allocation1 [shape = 'u32[144,128]{1,0:T(1,128)}', space=vmem, size = 0x12000, scoped, tag = 'internal scratch']
  %s0 = inlined_call_operand.hbm [shape: f32[2,4,8,8], index: 0, kind: input, shape index: {}]
  %s1 = inlined_call_operand.hbm [shape: f32[2,4,8,8], index: 1, kind: input, shape index: {}]
  %s2 = inlined_call_operand.hbm [shape: f32[2,4,8,8], index: 2, kind: input, shape index: {}]
  %s3 = inlined_call_operand.hbm [shape: f32[2,8,8], index: 3, kind: input, shape index: {}]
  %s4 = inlined_call_operand.hbm [shape: f32[2,4,8,8], index: 4, kind: output, shape index: {}]
  %s5 = sld [smem:[#allocation0]]
  $region65: #{tpu_custom_call.1} parent=0
    _
  %s7 = ssub.s32 1, %s5
  %s8 = scalar_select 0, %s7, %s5
  $region1: #{tpu_custom_call.1} parent=0
    #allocation2 [shape = 'u8[8192]{0}', space=vmem, size = 0x2000, scoped, tag = 'input window, operand 0']
    #allocation3 [shape = 's32[2]{0}', space=sflag, size = 0x8, scoped, tag = 'scoped memory for tpu_custom_call.1']
    #allocation4 [shape = 's32[2]{0}', space=sflag, size = 0x8, scoped, tag = 'scoped memory for tpu_custom_call.1']
    #allocation5 [shape = 'u8[8192]{0}', space=vmem, size = 0x2000, scoped, tag = 'input window, operand 1']
    #allocation6 [shape = 's32[2]{0}', space=sflag, size = 0x8, scoped, tag = 'scoped memory for tpu_custom_call.1']
    #allocation7 [shape = 'u8[8192]{0}', space=vmem, size = 0x2000, scoped, tag = 'input window, operand 2']
    #allocation8 [shape = 'u8[8192]{0}', space=vmem, size = 0x2000, scoped, tag = 'input window, operand 3']
    #allocation9 [shape = 's32[2]{0}', space=sflag, size = 0x8, scoped, tag = 'scoped memory for tpu_custom_call.1']
    #allocation10 [shape = 'u8[8192]{0}', space=vmem, size = 0x2000, scoped, tag = 'output window, operand 0']
    %9 = vsyncpa [#allocation3], 0
    %s10 = scalar_lea.sflag [#allocation3], 1
    %11 = vsyncpa %s10, 0
    %12 = vsyncpa [#allocation6], 0
    %s13 = scalar_lea.sflag [#allocation6], 1
    %14 = vsyncpa %s13, 0
    %15 = vsyncpa [#allocation9], 0
    %s16 = scalar_lea.sflag [#allocation9], 1
    %17 = vsyncpa %s16, 0
    %18 = vsyncpa [#allocation4], 0
    %s19 = scalar_lea.sflag [#allocation4], 1
    %20 = vsyncpa %s19, 0
    loop: start=0, step=1, limit=10
    $region2: #{tpu_custom_call.1} parent=1 // loop_pre_header
      _
    $region3: #{tpu_custom_call.1} parent=1 // loop_header
      %s22 = sphi 0, %s26
      %p23 = scmp.ge.s32.totalorder %s22, 10
      %s29 = sphi 0, %s41
      %s30 = sphi 0, %s37
      %s31 = sphi 0, %s29
      %s32 = sphi 0, %s30
      %s33 = sphi 0, %s31
      %s34 = sphi 0, %s32
      %s46 = sphi 0, %s48
      %s49 = sphi 0, %s46
      %s50 = sphi 0, %s49
      %s66 = sphi 0, %s50
      %s74 = sphi 0, %s76
      %s77 = sphi 0, %s74
      %s78 = sphi 0, %s77
      %s94 = sphi 0, %s78
      %s102 = sphi 0, %s104
      %s105 = sphi 0, %s102
      %s106 = sphi 0, %s105
      %s122 = sphi 0, %s106
      %s128 = sphi 0, %s130
      %s131 = sphi 0, %s128
      %s132 = sphi 0, %s131
      %s148 = sphi 0, %s132
      %s156 = sphi 0, %s158
      %s159 = sphi 0, %s156
      %s160 = sphi 0, %s159
      %s176 = sphi 0, %s160
    $region4: #{tpu_custom_call.1} parent=1 // loop_header_branch
      %25 = sbr.rel (%p23) target = $region8
    $region5: #{tpu_custom_call.1} parent=1 // loop_body
      %s27 = ssub.s32 %s22, 1
      %s28 = ssub.s32 %s22, 2
      %s35 = sadd.s32 1, %s30
      %p36 = scmp.ge.s32.totalorder %s35, 4
      %s37 = scalar_select %p36, 0, %s35
      %s38 = sadd.s32 1, %s29
      %s39 = scalar_select %p36, %s38, %s29
      %p40 = scmp.ge.s32.totalorder %s39, 2
      %s41 = scalar_select %p40, 0, %s39
      %s42 = ssub.s32 %s29, %s41
      %s43 = ssub.s32 %s30, %s37
      %s44 = sor.u32 %s42, %s43
      %p45 = scmp.eq.s32.totalorder %s44, 0
      %s47 = sadd.s32 %s46, 1
      %s48 = scalar_select %p45, %s46, %s47
      %p51 = pneg %p45
      %p52 = scmp.eq.s32.totalorder %s22, 7
      %p53 = por %p51, %p52
      %p54 = scmp.ne.s32.totalorder %s46, %s49
      %p55 = scmp.eq.s32.totalorder %s22, 0
      %p56 = por %p54, %p55
      %p57 = scmp.ne.s32.totalorder %s46, %s49
      %p58 = scmp.eq.s32.totalorder %s27, 7
      %p59 = por %p57, %p58
      %p60 = scmp.ne.s32.totalorder %s49, %s50
      %p61 = scmp.eq.s32.totalorder %s27, 0
      %p62 = por %p60, %p61
      %p63 = scmp.ne.s32.totalorder %s49, %s50
      %p64 = scmp.eq.s32.totalorder %s28, 7
      %p65 = por %p63, %p64
      %p67 = scmp.ne.s32.totalorder %s50, %s66
      %p68 = scmp.eq.s32.totalorder %s28, 0
      %p69 = por %p67, %p68
      %s70 = ssub.s32 %s29, %s41
      %s71 = ssub.s32 %s30, %s37
      %s72 = sor.u32 %s70, %s71
      %p73 = scmp.eq.s32.totalorder %s72, 0
      %s75 = sadd.s32 %s74, 1
      %s76 = scalar_select %p73, %s74, %s75
      %p79 = pneg %p73
      %p80 = scmp.eq.s32.totalorder %s22, 7
      %p81 = por %p79, %p80
      %p82 = scmp.ne.s32.totalorder %s74, %s77
      %p83 = scmp.eq.s32.totalorder %s22, 0
      %p84 = por %p82, %p83
      %p85 = scmp.ne.s32.totalorder %s74, %s77
      %p86 = scmp.eq.s32.totalorder %s27, 7
      %p87 = por %p85, %p86
      %p88 = scmp.ne.s32.totalorder %s77, %s78
      %p89 = scmp.eq.s32.totalorder %s27, 0
      %p90 = por %p88, %p89
      %p91 = scmp.ne.s32.totalorder %s77, %s78
      %p92 = scmp.eq.s32.totalorder %s28, 7
      %p93 = por %p91, %p92
      %p95 = scmp.ne.s32.totalorder %s78, %s94
      %p96 = scmp.eq.s32.totalorder %s28, 0
      %p97 = por %p95, %p96
      %s98 = ssub.s32 %s29, %s41
      %s99 = ssub.s32 %s30, %s37
      %s100 = sor.u32 %s98, %s99
      %p101 = scmp.eq.s32.totalorder %s100, 0
      %s103 = sadd.s32 %s102, 1
      %s104 = scalar_select %p101, %s102, %s103
      %p107 = pneg %p101
      %p108 = scmp.eq.s32.totalorder %s22, 7
      %p109 = por %p107, %p108
      %p110 = scmp.ne.s32.totalorder %s102, %s105
      %p111 = scmp.eq.s32.totalorder %s22, 0
      %p112 = por %p110, %p111
      %p113 = scmp.ne.s32.totalorder %s102, %s105
      %p114 = scmp.eq.s32.totalorder %s27, 7
      %p115 = por %p113, %p114
      %p116 = scmp.ne.s32.totalorder %s105, %s106
      %p117 = scmp.eq.s32.totalorder %s27, 0
      %p118 = por %p116, %p117
      %p119 = scmp.ne.s32.totalorder %s105, %s106
      %p120 = scmp.eq.s32.totalorder %s28, 7
      %p121 = por %p119, %p120
      %p123 = scmp.ne.s32.totalorder %s106, %s122
      %p124 = scmp.eq.s32.totalorder %s28, 0
      %p125 = por %p123, %p124
      %s126 = ssub.s32 %s29, %s41
      %p127 = scmp.eq.s32.totalorder %s126, 0
      %s129 = sadd.s32 %s128, 1
      %s130 = scalar_select %p127, %s128, %s129
      %p133 = pneg %p127
      %p134 = scmp.eq.s32.totalorder %s22, 7
      %p135 = por %p133, %p134
      %p136 = scmp.ne.s32.totalorder %s128, %s131
      %p137 = scmp.eq.s32.totalorder %s22, 0
      %p138 = por %p136, %p137
      %p139 = scmp.ne.s32.totalorder %s128, %s131
      %p140 = scmp.eq.s32.totalorder %s27, 7
      %p141 = por %p139, %p140
      %p142 = scmp.ne.s32.totalorder %s131, %s132
      %p143 = scmp.eq.s32.totalorder %s27, 0
      %p144 = por %p142, %p143
      %p145 = scmp.ne.s32.totalorder %s131, %s132
      %p146 = scmp.eq.s32.totalorder %s28, 7
      %p147 = por %p145, %p146
      %p149 = scmp.ne.s32.totalorder %s132, %s148
      %p150 = scmp.eq.s32.totalorder %s28, 0
      %p151 = por %p149, %p150
      %s152 = ssub.s32 %s29, %s41
      %s153 = ssub.s32 %s30, %s37
      %s154 = sor.u32 %s152, %s153
      %p155 = scmp.eq.s32.totalorder %s154, 0
      %s157 = sadd.s32 %s156, 1
      %s158 = scalar_select %p155, %s156, %s157
      %p161 = pneg %p155
      %p162 = scmp.eq.s32.totalorder %s22, 7
      %p163 = por %p161, %p162
      %p164 = scmp.ne.s32.totalorder %s156, %s159
      %p165 = scmp.eq.s32.totalorder %s22, 0
      %p166 = por %p164, %p165
      %p167 = scmp.ne.s32.totalorder %s156, %s159
      %p168 = scmp.eq.s32.totalorder %s27, 7
      %p169 = por %p167, %p168
      %p170 = scmp.ne.s32.totalorder %s159, %s160
      %p171 = scmp.eq.s32.totalorder %s27, 0
      %p172 = por %p170, %p171
      %p173 = scmp.ne.s32.totalorder %s159, %s160
      %p174 = scmp.eq.s32.totalorder %s28, 7
      %p175 = por %p173, %p174
      %p177 = scmp.ne.s32.totalorder %s160, %s176
      %p178 = scmp.eq.s32.totalorder %s28, 0
      %p179 = por %p177, %p178
      %p180 = scmp.le.s32.totalorder 1, %s22
      %p181 = scmp.lt.s32.totalorder %s22, 9
      %p182 = pnand %p180, %p181
      %p183 = pneg %p182
      // Predicated region
      $region9: #{tpu_custom_call.1} parent=5 // pred_check
        _
      $region10: #{tpu_custom_call.1} parent=5 // pred_check_branch
        %185 = sbr.rel (%p182) target = $region12
      $region11: #{tpu_custom_call.1} parent=5 // pred_region
        %s186 = ssub.s32 %s22, 1
      $region12: #{tpu_custom_call.1} parent=5 // pred_fallthru
        _
      %p187 = scmp.lt.s32.totalorder %s22, 8
      // Predicated region
      $region13: #{tpu_custom_call.1} parent=5 // pred_check
        %p188 = pneg %p187
      $region14: #{tpu_custom_call.1} parent=5 // pred_check_branch
        %190 = sbr.rel (%p188) target = $region16
      $region15: #{tpu_custom_call.1} parent=5 // pred_region
        // Predicated region
        $region17: #{tpu_custom_call.1} parent=15 // pred_check
          %p191 = pneg %p56
        $region18: #{tpu_custom_call.1} parent=15 // pred_check_branch
          %193 = sbr.rel (%p191) target = $region20
        $region19: #{tpu_custom_call.1} parent=15 // pred_region
          %s194 = sand.u32 %s46, 1
          %s195 = scalar_lea.sflag [#allocation3], %s194
          %s196 = sand.u32 %s46, 1
          %s197 = smul.addr %s196, 8
          %s198 = scalar_lea.vmem [#allocation2], %s197
          %s200 = ssub.s32 128, 128
          %201 = vsyncadd %s195, %s200
          %s202 = smul.addr %s29, 4
          %s203 = sadd.s32 %s30, %s202
          %s204 = smul.addr %s203, 128
          %s205 = scalar_lea.hbm %s0, %s204
          %s207 = sshll.u32 %s198, 4
          %s208 = int_to_ptr.vmem [resolvable:$true] %s207
          %210 = dma.hbm_to_vmem [thread:$0]  %s205, 128, %s208, %s195
        $region20: #{tpu_custom_call.1} parent=15 // pred_fallthru
          _
        // Predicated region
        $region21: #{tpu_custom_call.1} parent=15 // pred_check
          %p211 = pneg %p84
        $region22: #{tpu_custom_call.1} parent=15 // pred_check_branch
          %213 = sbr.rel (%p211) target = $region24
        $region23: #{tpu_custom_call.1} parent=15 // pred_region
          %s214 = sand.u32 %s22, 1
          %s215 = scalar_lea.sflag [#allocation6], %s214
          %s216 = sand.u32 %s74, 1
          %s217 = smul.addr %s216, 8
          %s218 = scalar_lea.vmem [#allocation5], %s217
          %s220 = ssub.s32 128, 128
          %221 = vsyncadd %s215, %s220
          %s222 = smul.addr %s29, 4
          %s223 = sadd.s32 %s30, %s222
          %s224 = smul.addr %s223, 128
          %s225 = scalar_lea.hbm %s1, %s224
          %s227 = sshll.u32 %s218, 4
          %s228 = int_to_ptr.vmem [resolvable:$true] %s227
          %230 = dma.hbm_to_vmem [thread:$0]  %s225, 128, %s228, %s215
        $region24: #{tpu_custom_call.1} parent=15 // pred_fallthru
          _
        // Predicated region
        $region25: #{tpu_custom_call.1} parent=15 // pred_check
          %p231 = pneg %p112
        $region26: #{tpu_custom_call.1} parent=15 // pred_check_branch
          %233 = sbr.rel (%p231) target = $region28
        $region27: #{tpu_custom_call.1} parent=15 // pred_region
          %s234 = sand.u32 %s22, 1
          %s235 = scalar_lea.sflag [#allocation6], %s234
          %s236 = sand.u32 %s102, 1
          %s237 = smul.addr %s236, 8
          %s238 = scalar_lea.vmem [#allocation7], %s237
          %s240 = ssub.s32 128, 128
          %241 = vsyncadd %s235, %s240
          %s242 = smul.addr %s29, 4
          %s243 = sadd.s32 %s30, %s242
          %s244 = smul.addr %s243, 128
          %s245 = scalar_lea.hbm %s2, %s244
          %s247 = sshll.u32 %s238, 4
          %s248 = int_to_ptr.vmem [resolvable:$true] %s247
          %250 = dma.hbm_to_vmem [thread:$0]  %s245, 128, %s248, %s235
        $region28: #{tpu_custom_call.1} parent=15 // pred_fallthru
          _
        // Predicated region
        $region29: #{tpu_custom_call.1} parent=15 // pred_check
          %p251 = pneg %p138
        $region30: #{tpu_custom_call.1} parent=15 // pred_check_branch
          %253 = sbr.rel (%p251) target = $region32
        $region31: #{tpu_custom_call.1} parent=15 // pred_region
          %s254 = sand.u32 %s128, 1
          %s255 = scalar_lea.sflag [#allocation9], %s254
          %s256 = sand.u32 %s128, 1
          %s257 = smul.addr %s256, 8
          %s258 = scalar_lea.vmem [#allocation8], %s257
          %s260 = ssub.s32 128, 128
          %261 = vsyncadd %s255, %s260
          %s262 = smul.addr %s29, 128
          %s263 = scalar_lea.hbm %s3, %s262
          %s265 = sshll.u32 %s258, 4
          %s266 = int_to_ptr.vmem [resolvable:$true] %s265
          %268 = dma.hbm_to_vmem [thread:$0]  %s263, 128, %s266, %s255
        $region32: #{tpu_custom_call.1} parent=15 // pred_fallthru
          _
      $region16: #{tpu_custom_call.1} parent=5 // pred_fallthru
        _
      %p269 = scmp.le.s32.totalorder 1, %s22
      %p270 = scmp.lt.s32.totalorder %s22, 9
      %p271 = pnand %p269, %p270
      %p272 = pneg %p271
      // Predicated region
      $region33: #{tpu_custom_call.1} parent=5 // pred_check
        _
      $region34: #{tpu_custom_call.1} parent=5 // pred_check_branch
        %274 = sbr.rel (%p271) target = $region36
      $region35: #{tpu_custom_call.1} parent=5 // pred_region
        %s275 = ssub.s32 %s22, 1
        %s276 = sand.u32 %s49, 1
        %s277 = scalar_lea.sflag [#allocation3], %s276
        %s278 = sand.u32 %s49, 1
        %s279 = smul.addr %s278, 8
        %s280 = scalar_lea.vmem [#allocation2], %s279
        // Predicated region
        $region37: #{tpu_custom_call.1} parent=35 // pred_check
          %p281 = pneg %p62
        $region38: #{tpu_custom_call.1} parent=35 // pred_check_branch
          %283 = sbr.rel (%p281) target = $region40
        $region39: #{tpu_custom_call.1} parent=35 // pred_region
          %284 = dma.done %s277, 128
        $region40: #{tpu_custom_call.1} parent=35 // pred_fallthru
          _
        %s285 = sand.u32 %s27, 1
        %s286 = scalar_lea.sflag [#allocation6], %s285
        %s287 = sand.u32 %s77, 1
        %s288 = smul.addr %s287, 8
        %s289 = scalar_lea.vmem [#allocation5], %s288
        // Predicated region
        $region41: #{tpu_custom_call.1} parent=35 // pred_check
          %p290 = pneg %p90
        $region42: #{tpu_custom_call.1} parent=35 // pred_check_branch
          %292 = sbr.rel (%p290) target = $region44
        $region43: #{tpu_custom_call.1} parent=35 // pred_region
          %293 = dma.done %s286, 128
        $region44: #{tpu_custom_call.1} parent=35 // pred_fallthru
          _
        %s294 = sand.u32 %s27, 1
        %s295 = scalar_lea.sflag [#allocation6], %s294
        %s296 = sand.u32 %s105, 1
        %s297 = smul.addr %s296, 8
        %s298 = scalar_lea.vmem [#allocation7], %s297
        // Predicated region
        $region45: #{tpu_custom_call.1} parent=35 // pred_check
          %p299 = pneg %p118
        $region46: #{tpu_custom_call.1} parent=35 // pred_check_branch
          %301 = sbr.rel (%p299) target = $region48
        $region47: #{tpu_custom_call.1} parent=35 // pred_region
          %302 = dma.done %s295, 128
        $region48: #{tpu_custom_call.1} parent=35 // pred_fallthru
          _
        %s303 = sand.u32 %s131, 1
        %s304 = scalar_lea.sflag [#allocation9], %s303
        %s305 = sand.u32 %s131, 1
        %s306 = smul.addr %s305, 8
        %s307 = scalar_lea.vmem [#allocation8], %s306
        // Predicated region
        $region49: #{tpu_custom_call.1} parent=35 // pred_check
          %p308 = pneg %p144
        $region50: #{tpu_custom_call.1} parent=35 // pred_check_branch
          %310 = sbr.rel (%p308) target = $region52
        $region51: #{tpu_custom_call.1} parent=35 // pred_region
          %311 = dma.done %s304, 128
        $region52: #{tpu_custom_call.1} parent=35 // pred_fallthru
          _
        %s312 = sand.u32 %s49, 1
        %s313 = scalar_lea.sflag [#allocation3], %s312
        %s314 = sand.u32 %s49, 1
        %s315 = smul.addr %s314, 8
        %s316 = scalar_lea.vmem [#allocation2], %s315
        %p317 = pneg %p62
        %p318 = pneg %p59
        %s319 = sand.u32 %s27, 1
        %s320 = scalar_lea.sflag [#allocation6], %s319
        %s321 = sand.u32 %s77, 1
        %s322 = smul.addr %s321, 8
        %s323 = scalar_lea.vmem [#allocation5], %s322
        %p324 = pneg %p90
        %p325 = pneg %p87
        %s326 = sand.u32 %s27, 1
        %s327 = scalar_lea.sflag [#allocation6], %s326
        %s328 = sand.u32 %s105, 1
        %s329 = smul.addr %s328, 8
        %s330 = scalar_lea.vmem [#allocation7], %s329
        %p331 = pneg %p118
        %p332 = pneg %p115
        %s333 = sand.u32 %s131, 1
        %s334 = scalar_lea.sflag [#allocation9], %s333
        %s335 = sand.u32 %s131, 1
        %s336 = smul.addr %s335, 8
        %s337 = scalar_lea.vmem [#allocation8], %s336
        %p338 = pneg %p144
        %p339 = pneg %p141
        %p340 = pneg %p172
        %p341 = pneg %p169
        %s342 = sand.u32 %s159, 1
        %s343 = scalar_lea.sflag [#allocation4], %s342
        %s344 = sand.u32 %s159, 1
        %s345 = smul.addr %s344, 8
        %s346 = scalar_lea.vmem [#allocation10], %s345
        %v347 = vld [vmem:[%s280] sm:$0xff]
        %v348 = vld [vmem:[%s289] sm:$0xff]
        %v349 = vld [vmem:[%s298] sm:$0xff]
        %v350 = vld [vmem:[%s307] sm:$0xff]
        %vm351 = vcmask 64512
        %v353 = vsel %vm351, %v347, 0
        %v356 = vsel %vm351, %v348, 0
        %358 = vmatprep.subr.mxu0 0.0
        %359 = vmatpush1.xpose.msra.mxu0 %v356
        %360 = vmatprep.subr.mxu0 0.0
        %361 = vmatpush1.xpose.msra.mxu0 0.0
        %362 = vmatprep.subr.mxu0 0.0
        %363 = vmatpush1.xpose.msra.mxu0 0.0
        %364 = vmatprep.subr.mxu0 0.0
        %365 = vmatpush1.xpose.msra.mxu0 0.0
        %366 = vmatprep.subr.mxu0 0.0
        %367 = vmatpush1.xpose.msra.mxu0 0.0
        %368 = vmatprep.subr.mxu0 0.0
        %369 = vmatpush1.xpose.msra.mxu0 0.0
        %370 = vmatprep.subr.mxu0 0.0
        %371 = vmatpush1.xpose.msra.mxu0 0.0
        %372 = vmatprep.subr.mxu0 0.0
        %373 = vmatpush1.xpose.msra.mxu0 0.0
        %374 = vmatprep.subr.mxu0 0.0
        %375 = vmatpush1.xpose.msra.mxu0 0.0
        %376 = vmatprep.subr.mxu0 0.0
        %377 = vmatpush1.xpose.msra.mxu0 0.0
        %378 = vmatprep.subr.mxu0 0.0
        %379 = vmatpush1.xpose.msra.mxu0 0.0
        %380 = vmatprep.subr.mxu0 0.0
        %381 = vmatpush1.xpose.msra.mxu0 0.0
        %382 = vmatprep.subr.mxu0 0.0
        %383 = vmatpush1.xpose.msra.mxu0 0.0
        %384 = vmatprep.subr.mxu0 0.0
        %385 = vmatpush1.xpose.msra.mxu0 0.0
        %386 = vmatprep.subr.mxu0 0.0
        %387 = vmatpush1.xpose.msra.mxu0 0.0
        %388 = vmatprep.subr.mxu0 0.0
        %389 = vmatpush1.xpose.msra.mxu0 0.0
        %390 = vmatprep.subr.mxu0 0.0
        %391 = vmatpush1.xpose.msra.mxu0 0.0
        %392 = vmatprep.subr.mxu0 0.0
        %393 = vmatpush1.xpose.msra.mxu0 0.0
        %394 = vmatprep.subr.mxu0 0.0
        %395 = vmatpush1.xpose.msra.mxu0 0.0
        %396 = vmatprep.subr.mxu0 0.0
        %397 = vmatpush1.xpose.msra.mxu0 0.0
        %398 = vmatprep.subr.mxu0 0.0
        %399 = vmatpush1.xpose.msra.mxu0 0.0
        %400 = vmatprep.subr.mxu0 0.0
        %401 = vmatpush1.xpose.msra.mxu0 0.0
        %402 = vmatprep.subr.mxu0 0.0
        %403 = vmatpush1.xpose.msra.mxu0 0.0
        %404 = vmatprep.subr.mxu0 0.0
        %405 = vmatpush1.xpose.msra.mxu0 0.0
        %406 = vmatprep.subr.mxu0 0.0
        %407 = vmatpush1.xpose.msra.mxu0 0.0
        %408 = vmatprep.subr.mxu0 0.0
        %409 = vmatpush1.xpose.msra.mxu0 0.0
        %410 = vmatprep.subr.mxu0 0.0
        %411 = vmatpush1.xpose.msra.mxu0 0.0
        %412 = vmatprep.subr.mxu0 0.0
        %413 = vmatpush1.xpose.msra.mxu0 0.0
        %414 = vmatprep.subr.mxu0 0.0
        %415 = vmatpush1.xpose.msra.mxu0 0.0
        %416 = vmatprep.subr.mxu0 0.0
        %417 = vmatpush1.xpose.msra.mxu0 0.0
        %418 = vmatprep.subr.mxu0 0.0
        %419 = vmatpush1.xpose.msra.mxu0 0.0
        %420 = vmatprep.subr.mxu0 0.0
        %421 = vmatpush1.xpose.msra.mxu0 0.0
        %422 = vmatprep.mubr.f32.mxu0 0.0
        %423 = vmatmul.mubr.f32.gmra.mrb[0].mxu0 %v353
        %v424 = vpop.f32.mrb[0].mxu0
        %v425 = vadd.f32 0.0, %v424
        %v426 = vpop.f32.mrb[0].mxu0
        %427 = vdwg.mxu0
        %vm428 = vcmp.eq.f32.partialorder %v350, 0.0
        %v429 = vsel %vm428, -1e+30, %v425
        %v430 = vmul.f32 %v429, 0.17677669
        %v431 = vsel %vm351, %v430, -inf
        %432 = vmax.xlane.f32.xlu0 %v431
        %v433 = vpop.xlane.xlu0 %432
        %v434 = vsub.f32 %v430, %v433
        %v435 = vmul.f32 %v434, 1.442695
        %v436 = vpow.pop %v435
        %v437 = vsel %vm351, %v436, 0.0
        %438 = vadd.xlane.f32.xlu0 %v437
        %v439 = vpop.xlane.xlu0 %438
        %v440 = vrcp.pop %v439
        %v441 = vmul.f32 %v436, %v440
        %v443 = vsel %vm351, %v441, 0
        %445 = vmatprep.subr.mxu0 0.0
        %446 = vmatpush1.msra.mxu0 %v349
        %447 = vmatprep.subr.mxu0 0.0
        %448 = vmatpush1.msra.mxu0 0.0
        %449 = vmatprep.subr.mxu0 0.0
        %450 = vmatpush1.msra.mxu0 0.0
        %451 = vmatprep.subr.mxu0 0.0
        %452 = vmatpush1.msra.mxu0 0.0
        %453 = vmatprep.subr.mxu0 0.0
        %454 = vmatpush1.msra.mxu0 0.0
        %455 = vmatprep.subr.mxu0 0.0
        %456 = vmatpush1.msra.mxu0 0.0
        %457 = vmatprep.subr.mxu0 0.0
        %458 = vmatpush1.msra.mxu0 0.0
        %459 = vmatprep.subr.mxu0 0.0
        %460 = vmatpush1.msra.mxu0 0.0
        %461 = vmatprep.subr.mxu0 0.0
        %462 = vmatpush1.msra.mxu0 0.0
        %463 = vmatprep.subr.mxu0 0.0
        %464 = vmatpush1.msra.mxu0 0.0
        %465 = vmatprep.subr.mxu0 0.0
        %466 = vmatpush1.msra.mxu0 0.0
        %467 = vmatprep.subr.mxu0 0.0
        %468 = vmatpush1.msra.mxu0 0.0
        %469 = vmatprep.subr.mxu0 0.0
        %470 = vmatpush1.msra.mxu0 0.0
        %471 = vmatprep.subr.mxu0 0.0
        %472 = vmatpush1.msra.mxu0 0.0
        %473 = vmatprep.subr.mxu0 0.0
        %474 = vmatpush1.msra.mxu0 0.0
        %475 = vmatprep.subr.mxu0 0.0
        %476 = vmatpush1.msra.mxu0 0.0
        %477 = vmatprep.subr.mxu0 0.0
        %478 = vmatpush1.msra.mxu0 0.0
        %479 = vmatprep.subr.mxu0 0.0
        %480 = vmatpush1.msra.mxu0 0.0
        %481 = vmatprep.subr.mxu0 0.0
        %482 = vmatpush1.msra.mxu0 0.0
        %483 = vmatprep.subr.mxu0 0.0
        %484 = vmatpush1.msra.mxu0 0.0
        %485 = vmatprep.subr.mxu0 0.0
        %486 = vmatpush1.msra.mxu0 0.0
        %487 = vmatprep.subr.mxu0 0.0
        %488 = vmatpush1.msra.mxu0 0.0
        %489 = vmatprep.subr.mxu0 0.0
        %490 = vmatpush1.msra.mxu0 0.0
        %491 = vmatprep.subr.mxu0 0.0
        %492 = vmatpush1.msra.mxu0 0.0
        %493 = vmatprep.subr.mxu0 0.0
        %494 = vmatpush1.msra.mxu0 0.0
        %495 = vmatprep.subr.mxu0 0.0
        %496 = vmatpush1.msra.mxu0 0.0
        %497 = vmatprep.subr.mxu0 0.0
        %498 = vmatpush1.msra.mxu0 0.0
        %499 = vmatprep.subr.mxu0 0.0
        %500 = vmatpush1.msra.mxu0 0.0
        %501 = vmatprep.subr.mxu0 0.0
        %502 = vmatpush1.msra.mxu0 0.0
        %503 = vmatprep.subr.mxu0 0.0
        %504 = vmatpush1.msra.mxu0 0.0
        %505 = vmatprep.subr.mxu0 0.0
        %506 = vmatpush1.msra.mxu0 0.0
        %507 = vmatprep.subr.mxu0 0.0
        %508 = vmatpush1.msra.mxu0 0.0
        %509 = vmatprep.mubr.f32.mxu0 0.0
        %510 = vmatmul.mubr.f32.gmra.mrb[0].mxu0 %v443
        %v511 = vpop.f32.mrb[0].mxu0
        %v512 = vadd.f32 0.0, %v511
        %v513 = vpop.f32.mrb[0].mxu0
        %514 = vdwg.mxu0
        %515 = vst.msk [vmem:[%s346] sm:$0xff] %vm351, %v512
        %s516 = sand.u32 %s159, 1
        %s517 = scalar_lea.sflag [#allocation4], %s516
        %s518 = sand.u32 %s159, 1
        %s519 = smul.addr %s518, 8
        %s520 = scalar_lea.vmem [#allocation10], %s519
        // Predicated region
        $region53: #{tpu_custom_call.1} parent=35 // pred_check
          %p521 = pneg %p169
        $region54: #{tpu_custom_call.1} parent=35 // pred_check_branch
          %523 = sbr.rel (%p521) target = $region56
        $region55: #{tpu_custom_call.1} parent=35 // pred_region
          %s525 = ssub.s32 128, 128
          %526 = vsyncadd %s517, %s525
          %s527 = smul.addr %s31, 4
          %s528 = sadd.s32 %s32, %s527
          %s529 = smul.addr %s528, 128
          %s530 = scalar_lea.hbm %s4, %s529
          %s532 = sshll.u32 %s520, 4
          %s533 = int_to_ptr.vmem [resolvable:$true] %s532
          %535 = dma.vmem_to_hbm [thread:$0]  %s533, 128, %s530, %s517
        $region56: #{tpu_custom_call.1} parent=35 // pred_fallthru
          _
      $region36: #{tpu_custom_call.1} parent=5 // pred_fallthru
        _
      %p536 = scmp.le.s32.totalorder 2, %s22
      // Predicated region
      $region57: #{tpu_custom_call.1} parent=5 // pred_check
        %p537 = pneg %p536
      $region58: #{tpu_custom_call.1} parent=5 // pred_check_branch
        %539 = sbr.rel (%p537) target = $region60
      $region59: #{tpu_custom_call.1} parent=5 // pred_region
        %s540 = ssub.s32 %s22, 2
        // Predicated region
        $region61: #{tpu_custom_call.1} parent=59 // pred_check
          %p541 = pneg %p175
        $region62: #{tpu_custom_call.1} parent=59 // pred_check_branch
          %543 = sbr.rel (%p541) target = $region64
        $region63: #{tpu_custom_call.1} parent=59 // pred_region
          %s544 = sand.u32 %s160, 1
          %s545 = scalar_lea.sflag [#allocation4], %s544
          %s546 = sand.u32 %s160, 1
          %s547 = smul.addr %s546, 8
          %s548 = scalar_lea.vmem [#allocation10], %s547
          %549 = dma.done %s545, 128
        $region64: #{tpu_custom_call.1} parent=59 // pred_fallthru
          _
      $region60: #{tpu_custom_call.1} parent=5 // pred_fallthru
        _
    $region6: #{tpu_custom_call.1} parent=1 // loop_footer
      %s26 = sadd.s32 1, %s22
    $region7: #{tpu_custom_call.1} parent=1 // loop_footer_branch
      %21 = sbr.rel target = $region3
    $region8: #{tpu_custom_call.1} parent=1 // loop_exit
      _
    %550 = vsyncpa [#allocation3], 1
    %s551 = scalar_lea.sflag [#allocation3], 1
    %552 = vsyncpa %s551, 1
    %553 = vsyncpa [#allocation6], 1
    %s554 = scalar_lea.sflag [#allocation6], 1
    %555 = vsyncpa %s554, 1
    %556 = vsyncpa [#allocation9], 1
    %s557 = scalar_lea.sflag [#allocation9], 1
    %558 = vsyncpa %s557, 1
    %559 = vsyncpa [#allocation4], 1
    %s560 = scalar_lea.sflag [#allocation4], 1
    %561 = vsyncpa %s560, 1

</llo_original>
